<compile_context>
chip_gen: v7x
topology: tpu7x:2x2x1
jax: 0.10.0
libtpu: 0.0.40
codegen_flags: <defaults>
</compile_context>

<pallas_src>
import functools

import jax
import jax.numpy as jnp
from jax import lax
from jax.experimental import pallas as pl
from jax.experimental.pallas import tpu as pltpu

BN_EPS = 1e-5
LANE = 128
MAX_TILE_M = 1024   # rows (N*Ho*Wo) per grid step (mem-bound sweet spot per roofline data)


def _round_up(x, m):
    return (x + m - 1) // m * m


def _pick_tile_m(m):
    """Largest tile <= MAX_TILE_M, multiple of 16 (bf16 sublane packing), but small
    enough that the grid keeps >= 2 steps whenever possible (v7x megacore)."""
    half = _round_up((m + 1) // 2, 16)
    return max(16, min(MAX_TILE_M, half))


# ---------------------------------------------------------------------------
# Fused kernel: conv-as-matmul over the K-concatenated patches (bf16 operands,
# f32 accumulation) + fused bias + ReLU for all branches at once.
# Writes the activation tile in bf16 and per-tile BN partials (sum, centered M2).
# ---------------------------------------------------------------------------
def _conv_relu_stats_kernel(p_ref, w_ref, b_ref, y_ref, s_ref, *, m_valid, tm, nt):
    acc = jnp.dot(p_ref[...], w_ref[...], preferred_element_type=jnp.float32)
    acc = jnp.maximum(acc + b_ref[...], 0.0)          # conv bias + ReLU, f32 epilogue
    y_ref[...] = acc.astype(jnp.bfloat16)             # bf16 activation storage

    # Steady state: unmasked per-tile partials (sum, centered M2), taken from the
    # f32 accumulator. Two direct row-block stores, no concatenate temporary.
    ssum = jnp.sum(acc, axis=0, keepdims=True)         # (1, CP)
    tmean = ssum * (1.0 / tm)
    d = acc - tmean
    s_ref[0, 0:1, :] = ssum
    s_ref[0, 1:2, :] = jnp.sum(d * d, axis=0, keepdims=True)

    if m_valid % tm != 0:
        # M-padding exists: only the last tile needs the masked recompute.
        @pl.when(pl.program_id(0) == nt - 1)
        def _():
            last_cnt = m_valid - (nt - 1) * tm          # static Python int
            row = (nt - 1) * tm + lax.broadcasted_iota(jnp.int32, (tm, 1), 0)
            mask = row < m_valid
            accm = jnp.where(mask, acc, 0.0)
            msum = jnp.sum(accm, axis=0, keepdims=True)
            mmean = msum * (1.0 / last_cnt)
            dm = jnp.where(mask, acc - mmean, 0.0)
            s_ref[0, 0:1, :] = msum
            s_ref[0, 1:2, :] = jnp.sum(dm * dm, axis=0, keepdims=True)


def _fused_conv_relu_stats(patches, w_fused, b_fused):
    """patches: (M, K_total) bf16; w_fused: (K_total, CP) bf16; b_fused: (1, CP) f32."""
    m, k = patches.shape
    cp = w_fused.shape[1]
    tm = _pick_tile_m(m)
    m_pad = _round_up(m, tm)
    nt = m_pad // tm

    p = patches
    if m_pad != m:
        p = jnp.pad(p, ((0, m_pad - m), (0, 0)))

    kernel = functools.partial(_conv_relu_stats_kernel, m_valid=m, tm=tm, nt=nt)
    y, stats = pl.pallas_call(
        kernel,
        out_shape=(jax.ShapeDtypeStruct((m_pad, cp), jnp.bfloat16),
                   jax.ShapeDtypeStruct((nt, 2, cp), jnp.float32)),
        grid=(nt,),
        in_specs=[
            pl.BlockSpec((tm, k), lambda i: (i, 0)),       # patches tile (pipelined)
            pl.BlockSpec((k, cp), lambda i: (0, 0)),       # fused block-diag weight
            pl.BlockSpec((1, cp), lambda i: (0, 0)),       # fused bias
        ],
        out_specs=(
            pl.BlockSpec((tm, cp), lambda i: (i, 0)),      # bf16 activation tile
            pl.BlockSpec((1, 2, cp), lambda i: (i, 0, 0)),  # per-tile BN partials
        ),
        compiler_params=pltpu.CompilerParams(
            dimension_semantics=("parallel",),             # split M across TCs (v7x)
            vmem_limit_bytes=32 * 1024 * 1024),            # <= 48 MiB budget on v7x
        cost_estimate=pl.CostEstimate(
            flops=2 * m_pad * k * cp,
            transcendentals=0,
            bytes_accessed=m_pad * k * 2 + k * cp * 2 + cp * 4
                           + m_pad * cp * 2 + nt * 2 * cp * 4),
    )(p, w_fused, b_fused)
    return y, stats, tm, nt


def _combine_bn_stats(stats, m, tm, nt):
    """Chan/Welford combination of per-tile (sum, centered-M2) -> (mean, biased var)."""
    counts = jnp.concatenate(
        [jnp.full((nt - 1,), float(tm), jnp.float32),
         jnp.array([float(m - (nt - 1) * tm)], jnp.float32)])
    tsum = stats[:, 0, :]                                  # (nt, CP)
    tm2 = stats[:, 1, :]                                   # (nt, CP)
    tmean = tsum / counts[:, None]
    gmean = jnp.sum(tsum, axis=0) / m                      # (CP,)
    gm2 = (jnp.sum(tm2, axis=0)
           + jnp.sum(counts[:, None] * (tmean - gmean[None, :]) ** 2, axis=0))
    var = jnp.maximum(gm2 / m, 0.0)                        # biased var (BN training norm)
    return gmean, var


# ---------------------------------------------------------------------------
# im2col glue (XLA side, bf16 patches)
# ---------------------------------------------------------------------------
def _conv_out_size(size, k, s, p, d):
    return (size + 2 * p - d * (k - 1) - 1) // s + 1


def _im2col(x, kh, kw, stride, padding, dilation):
    """x: (N, Cin, H, W) -> patches (N*Ho*Wo, Cin*Kh*Kw), plus (Ho, Wo)."""
    n, c, h, w = x.shape
    xp = jnp.pad(x, ((0, 0), (0, 0), (padding, padding), (padding, padding)))
    ho = _conv_out_size(h, kh, stride, padding, dilation)
    wo = _conv_out_size(w, kw, stride, padding, dilation)
    cols = []
    for i in range(kh):
        for j in range(kw):
            patch = xp[:, :,
                       i * dilation: i * dilation + stride * ho: stride,
                       j * dilation: j * dilation + stride * wo: stride]
            cols.append(patch)                              # (N, Cin, Ho, Wo)
    col = jnp.stack(cols, axis=2)                           # (N, Cin, KhKw, Ho, Wo)
    col = col.transpose(0, 3, 4, 1, 2)                      # (N, Ho, Wo, Cin, KhKw)
    return col.reshape(n * ho * wo, c * kh * kw), ho, wo


# ---------------------------------------------------------------------------
# Fused forward (jit-ed so the BN apply fuses into the slice/reshape/transpose)
# ---------------------------------------------------------------------------
def _forward(x, w_fused, b_fused, gamma, beta, *, geoms, cb):
    n = x.shape[0]
    nb = len(geoms)
    c_total = nb * cb

    xb = x.astype(jnp.bfloat16)                             # bf16 MXU operand contract
    plist = []
    hw = None
    for (kh, kw, s, p, d) in geoms:
        pat, ho, wo = _im2col(xb, kh, kw, s, p, d)
        if hw is None:
            hw = (ho, wo)
        elif hw != (ho, wo):
            raise ValueError("All branches must share the output spatial size.")
        plist.append(pat)
    ho, wo = hw

    # Branch fusion: K-concat patches -> one matmul against the block-diagonal weight.
    patches = plist[0] if nb == 1 else jnp.concatenate(plist, axis=1)
    m = patches.shape[0]

    y, stats, tm, nt = _fused_conv_relu_stats(patches, w_fused, b_fused)

    gmean, var = _combine_bn_stats(stats, m, tm, nt)
    scale = gamma * lax.rsqrt(var[:c_total] + BN_EPS)
    shift = beta - gmean[:c_total] * scale

    # BN apply + channel slice; XLA fuses this into the final layout transform.
    out2d = y[:m, :c_total].astype(jnp.float32) * scale[None, :] + shift[None, :]
    return out2d.reshape(n, ho, wo, c_total).transpose(0, 3, 1, 2)   # NCHW


# ---------------------------------------------------------------------------
# Module-equivalent wrapper
# ---------------------------------------------------------------------------
class MultiScaleConv2D:
    def __init__(self, in_channels, out_channels, kernel, stride, padding,
                 dilation, bias=True, key=None):
        if out_channels // len(dilation) <= 0:
            raise ValueError("Specified Number of Output Channels is too few!")
        self.in_channels = in_channels
        self.out_channels = out_channels
        self.kernel = kernel
        self.stride = stride
        self.padding = padding
        self.dilation = dilation
        self.use_bias = bias

        nb = len(dilation)
        cb = out_channels // nb
        key = jax.random.PRNGKey(0) if key is None else key

        self.params = []
        for i in range(nb):
            key, kw_, kb_ = jax.random.split(key, 3)
            kh = kw = kernel[i]
            fan_in = in_channels * kh * kw
            bound = 1.0 / (fan_in ** 0.5)
            w = jax.random.uniform(kw_, (cb, in_channels, kh, kw),
                                   jnp.float32, -bound, bound)
            b = (jax.random.uniform(kb_, (cb,), jnp.float32, -bound, bound)
                 if bias else jnp.zeros((cb,), jnp.float32))
            gamma = jnp.ones((cb,), jnp.float32)            # BatchNorm affine init
            beta = jnp.zeros((cb,), jnp.float32)
            self.params.append((w, b, gamma, beta))

        # Pre-assemble the fused (block-diagonal) weight / bias / affine params.
        k_sizes = [in_channels * kernel[i] * kernel[i] for i in range(nb)]
        k_total = sum(k_sizes)
        c_total = nb * cb
        cp = _round_up(c_total, LANE)                       # lane-dense output slab
        wf = jnp.zeros((k_total, cp), jnp.float32)
        bf = jnp.zeros((1, cp), jnp.float32)
        koff = 0
        for bi, (w, b, _, _) in enumerate(self.params):
            kb = k_sizes[bi]
            wf = wf.at[koff:koff + kb, bi * cb:(bi + 1) * cb].set(w.reshape(cb, kb).T)
            bf = bf.at[0, bi * cb:(bi + 1) * cb].set(b)
            koff += kb
        self.w_fused = wf.astype(jnp.bfloat16)              # bf16 MXU operand
        self.b_fused = bf                                   # f32 epilogue
        self.gamma = jnp.concatenate([p[2] for p in self.params])
        self.beta = jnp.concatenate([p[3] for p in self.params])

        geoms = tuple((kernel[i], kernel[i], stride[i], padding[i], dilation[i])
                      for i in range(nb))
        self._fwd = jax.jit(functools.partial(_forward, geoms=geoms, cb=cb))

    def __call__(self, x):
        return self._fwd(x, self.w_fused, self.b_fused, self.gamma, self.beta)


# ---------------------------------------------------------------------------
# Pure-JAX reference (bf16-operand / f32-accumulate conv, f32 BN)
# ---------------------------------------------------------------------------
def _reference(x, module):
    outs = []
    for i, (w, b, gamma, beta) in enumerate(module.params):
        s, p, d = module.stride[i], module.padding[i], module.dilation[i]
        y = lax.conv_general_dilated(
            x.astype(jnp.bfloat16), w.astype(jnp.bfloat16),
            window_strides=(s, s), padding=[(p, p), (p, p)],
            rhs_dilation=(d, d),
            dimension_numbers=("NCHW", "OIHW", "NCHW"),
            preferred_element_type=jnp.float32)
        y = jnp.maximum(y + b[None, :, None, None], 0.0)
        mean = jnp.mean(y, axis=(0, 2, 3), keepdims=True)
        var = jnp.mean((y - mean) ** 2, axis=(0, 2, 3), keepdims=True)
        y = (y - mean) * lax.rsqrt(var + BN_EPS)
        y = y * gamma[None, :, None, None] + beta[None, :, None, None]
        outs.append(y)
    return jnp.concatenate(outs, axis=1)


if __name__ == "__main__":
    # Branch configs chosen so all branches share the same output spatial size
    # (required for the channel concat), exactly as the PyTorch module is used.
    in_channels, out_channels = 4, 8
    kernel = [3, 3]
    stride = [1, 1]
    padding = [1, 2]
    dilation = [1, 2]

    key = jax.random.PRNGKey(0)
    kx, kp = jax.random.split(key)
    x = jax.random.normal(kx, (2, in_channels, 16, 16), jnp.float32)

    module = MultiScaleConv2D(in_channels, out_channels, kernel, stride,
                              padding, dilation, bias=True, key=kp)

    out = jax.block_until_ready(module(x))
    ref = jax.block_until_ready(_reference(x, module))

    assert out.shape == (2, out_channels, 16, 16), out.shape
    err = float(jnp.max(jnp.abs(out - ref)))
    # Tolerance reflects the documented precision contract: bf16 MXU operands and bf16
    # activation storage (y) vs. the f32-activation reference; stats are f32 throughout.
    assert jnp.allclose(out, ref, atol=1e-2, rtol=1e-2), err
    print("KERNEL_OK")
</pallas_src>

<mosaic_0001>
module attributes {stable_mosaic.version = 11 : i64} {
  func.func @_conv_relu_stats_kernel(%arg0: i32, %arg1: memref<256x72xbf16, #tpu.memory_space<vmem>>, %arg2: memref<72x128xbf16, #tpu.memory_space<vmem>>, %arg3: memref<1x128xf32, #tpu.memory_space<vmem>>, %arg4: memref<256x128xbf16, #tpu.memory_space<vmem>>, %arg5: memref<1x2x128xf32, #tpu.memory_space<vmem>>) attributes {dimension_semantics = [#tpu.dimension_semantics<parallel>], iteration_bounds = array<i64: 2>, scalar_prefetch = 0 : i64, scratch_operands = 0 : i64, tpu.core_type = #tpu.core_type<tc>, window_params = [{transform_indices = @transform_0, window_bounds = array<i64: 256, 72>}, {pipeline_mode = #tpu.pipeline_mode<synchronous>, transform_indices = @transform_1, window_bounds = array<i64: 72, 128>}, {pipeline_mode = #tpu.pipeline_mode<synchronous>, transform_indices = @transform_2, window_bounds = array<i64: 1, 128>}, {transform_indices = @transform_3, window_bounds = array<i64: 256, 128>}, {transform_indices = @transform_4, window_bounds = array<i64: 1, 2, 128>}]} {
    %c0 = arith.constant 0 : index
    %c0_0 = arith.constant 0 : index
    %0 = vector.load %arg1[%c0, %c0_0] : memref<256x72xbf16, #tpu.memory_space<vmem>>, vector<256x72xbf16>
    %c0_1 = arith.constant 0 : index
    %c0_2 = arith.constant 0 : index
    %1 = vector.load %arg2[%c0_1, %c0_2] : memref<72x128xbf16, #tpu.memory_space<vmem>>, vector<72x128xbf16>
    %cst = arith.constant dense<0.000000e+00> : vector<256x128xf32>
    %2 = tpu.matmul %0, %1, %cst {dimension_numbers = #tpu.dot_dimension_numbers<[1], [0], [0], [1], [0, 0, 1, 1], [], []>} : vector<256x72xbf16>, vector<72x128xbf16>, vector<256x128xf32> -> vector<256x128xf32>
    %c0_3 = arith.constant 0 : index
    %c0_4 = arith.constant 0 : index
    %3 = vector.load %arg3[%c0_3, %c0_4] : memref<1x128xf32, #tpu.memory_space<vmem>>, vector<1x128xf32>
    %4 = vector.broadcast %3 : vector<1x128xf32> to vector<256x128xf32>
    %5 = arith.addf %2, %4 : vector<256x128xf32>
    %cst_5 = arith.constant 0.000000e+00 : f32
    %6 = vector.broadcast %cst_5 : f32 to vector<256x128xf32>
    %7 = arith.maximumf %5, %6 : vector<256x128xf32>
    %8 = arith.truncf %7 : vector<256x128xf32> to vector<256x128xbf16>
    %c0_6 = arith.constant 0 : index
    %c0_7 = arith.constant 0 : index
    %9 = vector.load %arg4[%c0_6, %c0_7] : memref<256x128xbf16, #tpu.memory_space<vmem>>, vector<256x128xbf16>
    tpu.vector_store %arg4[%c0_6, %c0_7], %8 {strides = array<i32>} : memref<256x128xbf16, #tpu.memory_space<vmem>>, vector<256x128xbf16>,
    %cst_8 = arith.constant dense<0.000000e+00> : vector<128xf32>
    %10 = vector.multi_reduction <add>, %7, %cst_8 [0] : vector<256x128xf32> to vector<128xf32>
    %11 = vector.shape_cast %10 : vector<128xf32> to vector<1x128xf32>
    %cst_9 = arith.constant 3.906250e-03 : f32
    %12 = vector.broadcast %cst_9 : f32 to vector<1x128xf32>
    %13 = arith.mulf %11, %12 : vector<1x128xf32>
    %14 = vector.broadcast %13 : vector<1x128xf32> to vector<256x128xf32>
    %15 = arith.subf %7, %14 : vector<256x128xf32>
    %c0_10 = arith.constant 0 : index
    %c0_11 = arith.constant 0 : index
    %c0_12 = arith.constant 0 : index
    %16 = vector.load %arg5[%c0_10, %c0_11, %c0_12] : memref<1x2x128xf32, #tpu.memory_space<vmem>>, vector<1x1x128xf32>
    %17 = vector.shape_cast %16 : vector<1x1x128xf32> to vector<1x128xf32>
    %18 = vector.shape_cast %11 : vector<1x128xf32> to vector<1x1x128xf32>
    tpu.vector_store %arg5[%c0_10, %c0_11, %c0_12], %18 {strides = array<i32>} : memref<1x2x128xf32, #tpu.memory_space<vmem>>, vector<1x1x128xf32>,
    %19 = arith.mulf %15, %15 : vector<256x128xf32>
    %cst_13 = arith.constant dense<0.000000e+00> : vector<128xf32>
    %20 = vector.multi_reduction <add>, %19, %cst_13 [0] : vector<256x128xf32> to vector<128xf32>
    %21 = vector.shape_cast %20 : vector<128xf32> to vector<1x128xf32>
    %c0_14 = arith.constant 0 : index
    %c1 = arith.constant 1 : index
    %c0_15 = arith.constant 0 : index
    %22 = vector.load %arg5[%c0_14, %c1, %c0_15] : memref<1x2x128xf32, #tpu.memory_space<vmem>>, vector<1x1x128xf32>
    %23 = vector.shape_cast %22 : vector<1x1x128xf32> to vector<1x128xf32>
    %24 = vector.shape_cast %21 : vector<1x128xf32> to vector<1x1x128xf32>
    tpu.vector_store %arg5[%c0_14, %c1, %c0_15], %24 {strides = array<i32>} : memref<1x2x128xf32, #tpu.memory_space<vmem>>, vector<1x1x128xf32>,
    return
  }
  func.func @transform_0(%arg0: i32) -> (i32, i32) {
    %c0_i32 = arith.constant 0 : i32
    %c0_i32_0 = arith.constant 0 : i32
    return %arg0, %c0_i32 : i32, i32
  }
  func.func @transform_1(%arg0: i32) -> (i32, i32) {
    %c0_i32 = arith.constant 0 : i32
    %c0_i32_0 = arith.constant 0 : i32
    %c0_i32_1 = arith.constant 0 : i32
    return %c0_i32, %c0_i32_0 : i32, i32
  }
  func.func @transform_2(%arg0: i32) -> (i32, i32) {
    %c0_i32 = arith.constant 0 : i32
    %c0_i32_0 = arith.constant 0 : i32
    %c0_i32_1 = arith.constant 0 : i32
    return %c0_i32, %c0_i32_0 : i32, i32
  }
  func.func @transform_3(%arg0: i32) -> (i32, i32) {
    %c0_i32 = arith.constant 0 : i32
    %c0_i32_0 = arith.constant 0 : i32
    return %arg0, %c0_i32 : i32, i32
  }
  func.func @transform_4(%arg0: i32) -> (i32, i32, i32) {
    %c0_i32 = arith.constant 0 : i32
    %c0_i32_0 = arith.constant 0 : i32
    %c0_i32_1 = arith.constant 0 : i32
    return %arg0, %c0_i32, %c0_i32_0 : i32, i32, i32
  }
}

</mosaic_0001>

<llo_original>
// kernel: _forward.1
$region0: #{_forward.1}
  #allocation0 [shape = 'u32[]', space=smem, size = 0x4, offset = 0x4, fixed_abs, tag = 'smem constant byte address 0x4 - core index']
  #allocation1 [shape = 'u32[144,128]{1,0:T(1,128)}', space=vmem, size = 0x12000, scoped, tag = 'internal scratch']
  %s0 = inlined_call_operand.vmem [shape: bf16[512,72], index: 0, kind: input, shape index: {}]
  %s1 = inlined_call_operand.vmem [shape: bf16[72,128], index: 1, kind: input, shape index: {}]
  %s2 = inlined_call_operand.vmem [shape: f32[1,128], index: 2, kind: input, shape index: {}]
  %s3 = inlined_call_operand.vmem [shape: bf16[512,128], index: 3, kind: output, shape index: {0}]
  %s4 = inlined_call_operand.vmem [shape: f32[2,2,128], index: 4, kind: output, shape index: {1}]
  %5 = xla_tuple %s3, %s4
  %s6 = sld [smem:[#allocation0]]
  $region53: #{_forward.1} parent=0
    _
  %s8 = ssub.s32 1, %s6
  %s9 = scalar_select 0, %s8, %s6
  loop: start=0, step=1, limit=4
  $region2: #{_forward.1} parent=0 // loop_pre_header
    _
  $region3: #{_forward.1} parent=0 // loop_header
    %s11 = sphi 0, %s15
    %p12 = scmp.ge.s32.totalorder %s11, 4
    %s21 = sphi 0, %s23
    %s24 = sphi 0, %s21
    %s25 = sphi 0, %s24
    %s41 = sphi 0, %s25
    %s45 = sphi 0, %s45
    %s47 = sphi 0, %s45
    %s48 = sphi 0, %s47
    %s62 = sphi 0, %s48
    %s66 = sphi 0, %s66
    %s68 = sphi 0, %s66
    %s69 = sphi 0, %s68
    %s83 = sphi 0, %s69
    %s89 = sphi 0, %s91
    %s92 = sphi 0, %s89
    %s93 = sphi 0, %s92
    %s109 = sphi 0, %s93
    %s115 = sphi 0, %s117
    %s118 = sphi 0, %s115
    %s119 = sphi 0, %s118
    %s135 = sphi 0, %s119
  $region4: #{_forward.1} parent=0 // loop_header_branch
    %14 = sbr.rel (%p12) target = $region8
  $region5: #{_forward.1} parent=0 // loop_body
    %s16 = ssub.s32 %s11, 1
    %s17 = ssub.s32 %s11, 2
    %s18 = sadd.s32 %s11, 1
    %s19 = ssub.s32 %s11, %s18
    %p20 = scmp.eq.s32.totalorder %s19, 0
    %s22 = sadd.s32 %s21, 1
    %s23 = scalar_select %p20, %s21, %s22
    %p26 = pneg %p20
    %p27 = scmp.eq.s32.totalorder %s11, 1
    %p28 = por %p26, %p27
    %p29 = scmp.ne.s32.totalorder %s21, %s24
    %p30 = scmp.eq.s32.totalorder %s11, 0
    %p31 = por %p29, %p30
    %p32 = scmp.ne.s32.totalorder %s21, %s24
    %p33 = scmp.eq.s32.totalorder %s16, 1
    %p34 = por %p32, %p33
    %p35 = scmp.ne.s32.totalorder %s24, %s25
    %p36 = scmp.eq.s32.totalorder %s16, 0
    %p37 = por %p35, %p36
    %p38 = scmp.ne.s32.totalorder %s24, %s25
    %p39 = scmp.eq.s32.totalorder %s17, 1
    %p40 = por %p38, %p39
    %p42 = scmp.ne.s32.totalorder %s25, %s41
    %p43 = scmp.eq.s32.totalorder %s17, 0
    %p44 = por %p42, %p43
    %s46 = sadd.s32 %s45, 1
    %p49 = scmp.eq.s32.totalorder %s11, 1
    %p50 = scmp.ne.s32.totalorder %s45, %s47
    %p51 = scmp.eq.s32.totalorder %s11, 0
    %p52 = por %p50, %p51
    %p53 = scmp.ne.s32.totalorder %s45, %s47
    %p54 = scmp.eq.s32.totalorder %s16, 1
    %p55 = por %p53, %p54
    %p56 = scmp.ne.s32.totalorder %s47, %s48
    %p57 = scmp.eq.s32.totalorder %s16, 0
    %p58 = por %p56, %p57
    %p59 = scmp.ne.s32.totalorder %s47, %s48
    %p60 = scmp.eq.s32.totalorder %s17, 1
    %p61 = por %p59, %p60
    %p63 = scmp.ne.s32.totalorder %s48, %s62
    %p64 = scmp.eq.s32.totalorder %s17, 0
    %p65 = por %p63, %p64
    %s67 = sadd.s32 %s66, 1
    %p70 = scmp.eq.s32.totalorder %s11, 1
    %p71 = scmp.ne.s32.totalorder %s66, %s68
    %p72 = scmp.eq.s32.totalorder %s11, 0
    %p73 = por %p71, %p72
    %p74 = scmp.ne.s32.totalorder %s66, %s68
    %p75 = scmp.eq.s32.totalorder %s16, 1
    %p76 = por %p74, %p75
    %p77 = scmp.ne.s32.totalorder %s68, %s69
    %p78 = scmp.eq.s32.totalorder %s16, 0
    %p79 = por %p77, %p78
    %p80 = scmp.ne.s32.totalorder %s68, %s69
    %p81 = scmp.eq.s32.totalorder %s17, 1
    %p82 = por %p80, %p81
    %p84 = scmp.ne.s32.totalorder %s69, %s83
    %p85 = scmp.eq.s32.totalorder %s17, 0
    %p86 = por %p84, %p85
    %s87 = ssub.s32 %s11, %s18
    %p88 = scmp.eq.s32.totalorder %s87, 0
    %s90 = sadd.s32 %s89, 1
    %s91 = scalar_select %p88, %s89, %s90
    %p94 = pneg %p88
    %p95 = scmp.eq.s32.totalorder %s11, 1
    %p96 = por %p94, %p95
    %p97 = scmp.ne.s32.totalorder %s89, %s92
    %p98 = scmp.eq.s32.totalorder %s11, 0
    %p99 = por %p97, %p98
    %p100 = scmp.ne.s32.totalorder %s89, %s92
    %p101 = scmp.eq.s32.totalorder %s16, 1
    %p102 = por %p100, %p101
    %p103 = scmp.ne.s32.totalorder %s92, %s93
    %p104 = scmp.eq.s32.totalorder %s16, 0
    %p105 = por %p103, %p104
    %p106 = scmp.ne.s32.totalorder %s92, %s93
    %p107 = scmp.eq.s32.totalorder %s17, 1
    %p108 = por %p106, %p107
    %p110 = scmp.ne.s32.totalorder %s93, %s109
    %p111 = scmp.eq.s32.totalorder %s17, 0
    %p112 = por %p110, %p111
    %s113 = ssub.s32 %s11, %s18
    %p114 = scmp.eq.s32.totalorder %s113, 0
    %s116 = sadd.s32 %s115, 1
    %s117 = scalar_select %p114, %s115, %s116
    %p120 = pneg %p114
    %p121 = scmp.eq.s32.totalorder %s11, 1
    %p122 = por %p120, %p121
    %p123 = scmp.ne.s32.totalorder %s115, %s118
    %p124 = scmp.eq.s32.totalorder %s11, 0
    %p125 = por %p123, %p124
    %p126 = scmp.ne.s32.totalorder %s115, %s118
    %p127 = scmp.eq.s32.totalorder %s16, 1
    %p128 = por %p126, %p127
    %p129 = scmp.ne.s32.totalorder %s118, %s119
    %p130 = scmp.eq.s32.totalorder %s16, 0
    %p131 = por %p129, %p130
    %p132 = scmp.ne.s32.totalorder %s118, %s119
    %p133 = scmp.eq.s32.totalorder %s17, 1
    %p134 = por %p132, %p133
    %p136 = scmp.ne.s32.totalorder %s119, %s135
    %p137 = scmp.eq.s32.totalorder %s17, 0
    %p138 = por %p136, %p137
    %p139 = scmp.le.s32.totalorder 1, %s11
    %p140 = scmp.lt.s32.totalorder %s11, 3
    %p141 = pnand %p139, %p140
    %p142 = pneg %p141
    // Predicated region
    $region9: #{_forward.1} parent=5 // pred_check
      _
    $region10: #{_forward.1} parent=5 // pred_check_branch
      %144 = sbr.rel (%p141) target = $region12
    $region11: #{_forward.1} parent=5 // pred_region
      %s145 = ssub.s32 %s11, 1
      // Predicated region
      $region13: #{_forward.1} parent=11 // pred_check
        %p146 = pneg %p58
      $region14: #{_forward.1} parent=11 // pred_check_branch
        %148 = sbr.rel (%p146) target = $region16
      $region15: #{_forward.1} parent=11 // pred_region
        _
      $region16: #{_forward.1} parent=11 // pred_fallthru
        _
      // Predicated region
      $region17: #{_forward.1} parent=11 // pred_check
        %p149 = pneg %p79
      $region18: #{_forward.1} parent=11 // pred_check_branch
        %151 = sbr.rel (%p149) target = $region20
      $region19: #{_forward.1} parent=11 // pred_region
        _
      $region20: #{_forward.1} parent=11 // pred_fallthru
        _
    $region12: #{_forward.1} parent=5 // pred_fallthru
      _
    %p152 = scmp.lt.s32.totalorder %s11, 2
    // Predicated region
    $region21: #{_forward.1} parent=5 // pred_check
      %p153 = pneg %p152
    $region22: #{_forward.1} parent=5 // pred_check_branch
      %155 = sbr.rel (%p153) target = $region24
    $region23: #{_forward.1} parent=5 // pred_region
      // Predicated region
      $region25: #{_forward.1} parent=23 // pred_check
        %p156 = pneg %p31
      $region26: #{_forward.1} parent=23 // pred_check_branch
        %158 = sbr.rel (%p156) target = $region28
      $region27: #{_forward.1} parent=23 // pred_region
        %s159 = smul.u32 32, %s11
        %p160 = scmp.lt.s32.totalorder %s159, 63
        %s161 = scalar_select %p160, %s159, 63
        %s162 = smul.addr %s161, 4
        %s163 = scalar_lea.vmem %s0, %s162
        %s164 = smul.u32 32, %s11
      $region28: #{_forward.1} parent=23 // pred_fallthru
        _
    $region24: #{_forward.1} parent=5 // pred_fallthru
      _
    %p165 = scmp.le.s32.totalorder 1, %s11
    %p166 = scmp.lt.s32.totalorder %s11, 3
    %p167 = pnand %p165, %p166
    %p168 = pneg %p167
    // Predicated region
    $region29: #{_forward.1} parent=5 // pred_check
      _
    $region30: #{_forward.1} parent=5 // pred_check_branch
      %170 = sbr.rel (%p167) target = $region32
    $region31: #{_forward.1} parent=5 // pred_region
      %s171 = ssub.s32 %s11, 1
      %s172 = smul.u32 32, %s16
      %p173 = scmp.lt.s32.totalorder %s172, 63
      %s174 = scalar_select %p173, %s172, 63
      %s175 = smul.addr %s174, 4
      %s176 = scalar_lea.vmem %s0, %s175
      %p177 = pneg %p37
      %p178 = pneg %p34
      %p179 = pneg %p58
      %p180 = pneg %p55
      %p181 = pneg %p79
      %p182 = pneg %p76
      %p183 = pneg %p105
      %p184 = pneg %p102
      %s185 = smul.u32 32, %s16
      %p186 = scmp.lt.s32.totalorder %s185, 63
      %s187 = scalar_select %p186, %s185, 63
      %s188 = smul.addr %s187, 4
      %s189 = scalar_lea.vmem %s3, %s188
      %p190 = pneg %p131
      %p191 = pneg %p128
      %p192 = scmp.lt.s32.totalorder %s16, 1
      %s193 = scalar_select %p192, %s16, 1
      %s194 = smul.addr %s193, 2
      %s195 = scalar_lea.vmem %s4, %s194
      %s196 = smul.u32 32, %s16
      %p197 = scmp.lt.s32.totalorder %s196, 63
      %s198 = scalar_select %p197, %s196, 63
      %s199 = smul.addr %s198, 4
      %s200 = scalar_lea.vmem %s0, %s199
      %s201 = smul.u32 32, %s16
      %s202 = smul.u32 32, %s16
      %p203 = scmp.lt.s32.totalorder %s202, 63
      %s204 = scalar_select %p203, %s202, 63
      %s205 = smul.addr %s204, 4
      %s206 = scalar_lea.vmem %s3, %s205
      %s207 = smul.u32 32, %s16
      %p208 = scmp.lt.s32.totalorder %s16, 1
      %s209 = scalar_select %p208, %s16, 1
      %s210 = smul.addr %s209, 2
      %s211 = scalar_lea.vmem %s4, %s210
      %v213 = vld [vmem:[%s200] sm:$0xf]
      %v214 = vld [vmem:[%s200 + $0x4] sm:$0xf]
      %v215 = vld [vmem:[%s200 + $0x8] sm:$0xf]
      %v216 = vld [vmem:[%s200 + $0xc] sm:$0xf]
      %v217 = vld [vmem:[%s200 + $0x10] sm:$0xf]
      %v218 = vld [vmem:[%s200 + $0x14] sm:$0xf]
      %v219 = vld [vmem:[%s200 + $0x18] sm:$0xf]
      %v220 = vld [vmem:[%s200 + $0x1c] sm:$0xf]
      %v221 = vld [vmem:[%s200 + $0x20] sm:$0xf]
      %v222 = vld [vmem:[%s200 + $0x24] sm:$0xf]
      %v223 = vld [vmem:[%s200 + $0x28] sm:$0xf]
      %v224 = vld [vmem:[%s200 + $0x2c] sm:$0xf]
      %v225 = vld [vmem:[%s200 + $0x30] sm:$0xf]
      %v226 = vld [vmem:[%s200 + $0x34] sm:$0xf]
      %v227 = vld [vmem:[%s200 + $0x38] sm:$0xf]
      %v228 = vld [vmem:[%s200 + $0x3c] sm:$0xf]
      %v229 = vld [vmem:[%s200 + $0x40] sm:$0xf]
      %v230 = vld [vmem:[%s200 + $0x44] sm:$0xf]
      %v231 = vld [vmem:[%s200 + $0x48] sm:$0xf]
      %v232 = vld [vmem:[%s200 + $0x4c] sm:$0xf]
      %v233 = vld [vmem:[%s200 + $0x50] sm:$0xf]
      %v234 = vld [vmem:[%s200 + $0x54] sm:$0xf]
      %v235 = vld [vmem:[%s200 + $0x58] sm:$0xf]
      %v236 = vld [vmem:[%s200 + $0x5c] sm:$0xf]
      %v237 = vld [vmem:[%s200 + $0x60] sm:$0xf]
      %v238 = vld [vmem:[%s200 + $0x64] sm:$0xf]
      %v239 = vld [vmem:[%s200 + $0x68] sm:$0xf]
      %v240 = vld [vmem:[%s200 + $0x6c] sm:$0xf]
      %v241 = vld [vmem:[%s200 + $0x70] sm:$0xf]
      %v242 = vld [vmem:[%s200 + $0x74] sm:$0xf]
      %v243 = vld [vmem:[%s200 + $0x78] sm:$0xf]
      %v244 = vld [vmem:[%s200 + $0x7c] sm:$0xf]
      %v245 = vld [vmem:[%s1] sm:$0xf]
      %v246 = vld [vmem:[%s1 + $0x4] sm:$0xf]
      %v247 = vld [vmem:[%s1 + $0x8] sm:$0xf]
      %v248 = vld [vmem:[%s1 + $0xc] sm:$0xf]
      %v249 = vld [vmem:[%s1 + $0x10] sm:$0xf]
      %v250 = vld [vmem:[%s1 + $0x14] sm:$0xf]
      %v251 = vld [vmem:[%s1 + $0x18] sm:$0xf]
      %v252 = vld [vmem:[%s1 + $0x1c] sm:$0xf]
      %v253 = vld [vmem:[%s1 + $0x20] sm:$0xf]
      %v254 = vld [vmem:[%s2] sm:$0x1]
      %v256 = vlaneseq
      %v257 = vshrl.u32 %v256, 7
      %v258 = vsub.s32 0, %v257
      %v259 = vrot.slane %v254, %v258
      %v293 = vunpack.c.l.b16 %v213
      %v294 = vunpack.c.l.b16 %v214
      %v295 = vunpack.c.l.b16 %v215
      %v296 = vunpack.c.l.b16 %v216
      %v297 = vunpack.c.l.b16 %v217
      %v298 = vunpack.c.l.b16 %v218
      %v299 = vunpack.c.l.b16 %v219
      %v300 = vunpack.c.l.b16 %v220
      %v301 = vunpack.c.l.b16 %v221
      %v302 = vunpack.c.l.b16 %v222
      %v303 = vunpack.c.l.b16 %v223
      %v304 = vunpack.c.l.b16 %v224
      %v305 = vunpack.c.l.b16 %v225
      %v306 = vunpack.c.l.b16 %v226
      %v307 = vunpack.c.l.b16 %v227
      %v308 = vunpack.c.l.b16 %v228
      %v309 = vunpack.c.l.b16 %v229
      %v310 = vunpack.c.l.b16 %v230
      %v311 = vunpack.c.l.b16 %v231
      %v312 = vunpack.c.l.b16 %v232
      %v313 = vunpack.c.l.b16 %v233
      %v314 = vunpack.c.l.b16 %v234
      %v315 = vunpack.c.l.b16 %v235
      %v316 = vunpack.c.l.b16 %v236
      %v317 = vunpack.c.l.b16 %v237
      %v318 = vunpack.c.l.b16 %v238
      %v319 = vunpack.c.l.b16 %v239
      %v320 = vunpack.c.l.b16 %v240
      %v321 = vunpack.c.l.b16 %v241
      %v322 = vunpack.c.l.b16 %v242
      %v323 = vunpack.c.l.b16 %v243
      %v324 = vunpack.c.l.b16 %v244
      %v325 = vpack.c.b16 %v294, %v293
      %v326 = vpack.c.b16 %v296, %v295
      %v327 = vpack.c.b16 %v298, %v297
      %v328 = vpack.c.b16 %v300, %v299
      %v329 = vpack.c.b16 %v302, %v301
      %v330 = vpack.c.b16 %v304, %v303
      %v331 = vpack.c.b16 %v306, %v305
      %v332 = vpack.c.b16 %v308, %v307
      %v333 = vpack.c.b16 %v310, %v309
      %v334 = vpack.c.b16 %v312, %v311
      %v335 = vpack.c.b16 %v314, %v313
      %v336 = vpack.c.b16 %v316, %v315
      %v337 = vpack.c.b16 %v318, %v317
      %v338 = vpack.c.b16 %v320, %v319
      %v339 = vpack.c.b16 %v322, %v321
      %v340 = vpack.c.b16 %v324, %v323
      %v350 = vunpack.c.l.b16 %v245
      %v351 = vunpack.c.l.b16 %v246
      %v352 = vunpack.c.l.b16 %v247
      %v353 = vunpack.c.l.b16 %v248
      %v354 = vunpack.c.l.b16 %v249
      %v355 = vunpack.c.l.b16 %v250
      %v356 = vunpack.c.l.b16 %v251
      %v357 = vunpack.c.l.b16 %v252
      %v358 = vunpack.c.l.b16 %v253
      %v359 = vpack.c.b16 %v351, %v350
      %v360 = vpack.c.b16 %v353, %v352
      %v361 = vpack.c.b16 %v355, %v354
      %v362 = vpack.c.b16 %v357, %v356
      %v363 = vpack.c.b16 %v358, %v358
      %vm368 = vcmask 588800
      %v370 = vsel %vm368, %v325, 0
      %v373 = vsel %vm368, %v326, 0
      %v376 = vsel %vm368, %v327, 0
      %v379 = vsel %vm368, %v328, 0
      %v382 = vsel %vm368, %v329, 0
      %v385 = vsel %vm368, %v330, 0
      %v388 = vsel %vm368, %v331, 0
      %v391 = vsel %vm368, %v332, 0
      %v394 = vsel %vm368, %v333, 0
      %v397 = vsel %vm368, %v334, 0
      %v400 = vsel %vm368, %v335, 0
      %v403 = vsel %vm368, %v336, 0
      %v406 = vsel %vm368, %v337, 0
      %v409 = vsel %vm368, %v338, 0
      %v412 = vsel %vm368, %v339, 0
      %v415 = vsel %vm368, %v340, 0
      %vm417 = vcmask 1043456
      %v419 = vsel %vm417, %v363, 0
      %421 = vmatprep.subr.bf16.mxu0 0
      %422 = vmatpush1.bf16.msra.mxu0 %v359
      %423 = vmatprep.subr.bf16.mxu0 0
      %424 = vmatpush1.bf16.msra.mxu0 %v360
      %425 = vmatprep.subr.bf16.mxu0 0
      %426 = vmatpush1.bf16.msra.mxu0 %v361
      %427 = vmatprep.subr.bf16.mxu0 0
      %428 = vmatpush1.bf16.msra.mxu0 %v362
      %429 = vmatprep.subr.bf16.mxu0 0
      %430 = vmatpush1.bf16.msra.mxu0 %v419
      %431 = vmatprep.subr.bf16.mxu0 0
      %432 = vmatpush1.bf16.msra.mxu0 0
      %433 = vmatprep.subr.bf16.mxu0 0
      %434 = vmatpush1.bf16.msra.mxu0 0
      %435 = vmatprep.subr.bf16.mxu0 0
      %436 = vmatpush1.bf16.msra.mxu0 0
      %437 = vmatprep.subr.bf16.mxu0 0
      %438 = vmatpush1.bf16.msra.mxu0 0
      %439 = vmatprep.subr.bf16.mxu0 0
      %440 = vmatpush1.bf16.msra.mxu0 0
      %441 = vmatprep.subr.bf16.mxu0 0
      %442 = vmatpush1.bf16.msra.mxu0 0
      %443 = vmatprep.subr.bf16.mxu0 0
      %444 = vmatpush1.bf16.msra.mxu0 0
      %445 = vmatprep.subr.bf16.mxu0 0
      %446 = vmatpush1.bf16.msra.mxu0 0
      %447 = vmatprep.subr.bf16.mxu0 0
      %448 = vmatpush1.bf16.msra.mxu0 0
      %449 = vmatprep.subr.bf16.mxu0 0
      %450 = vmatpush1.bf16.msra.mxu0 0
      %451 = vmatprep.subr.bf16.mxu0 0
      %452 = vmatpush1.bf16.msra.mxu0 0
      %453 = vmatprep.mubr.bf16.mxu0 0
      %454 = vmatmul.mubr.bf16.gmra.mrb[0].mxu0 %v370
      %v455 = vpop.f32.mrb[0].mxu0
      %v456 = vadd.f32 %v259, %v455
      %v457 = vpop.f32.mrb[0].mxu0
      %v458 = vpop.f32.mrb[0].mxu0
      %v459 = vadd.f32 %v259, %v458
      %v460 = vpop.f32.mrb[0].mxu0
      %461 = vmatprep.mubr.bf16.mxu0 0
      %462 = vmatmul.mubr.bf16.gmra.mrb[0].mxu0 %v373
      %v463 = vpop.f32.mrb[0].mxu0
      %v464 = vadd.f32 %v259, %v463
      %v465 = vpop.f32.mrb[0].mxu0
      %v466 = vpop.f32.mrb[0].mxu0
      %v467 = vadd.f32 %v259, %v466
      %v468 = vpop.f32.mrb[0].mxu0
      %469 = vmatprep.mubr.bf16.mxu0 0
      %470 = vmatmul.mubr.bf16.gmra.mrb[0].mxu0 %v376
      %v471 = vpop.f32.mrb[0].mxu0
      %v472 = vadd.f32 %v259, %v471
      %v473 = vpop.f32.mrb[0].mxu0
      %v474 = vpop.f32.mrb[0].mxu0
      %v475 = vadd.f32 %v259, %v474
      %v476 = vpop.f32.mrb[0].mxu0
      %477 = vmatprep.mubr.bf16.mxu0 0
      %478 = vmatmul.mubr.bf16.gmra.mrb[0].mxu0 %v379
      %v479 = vpop.f32.mrb[0].mxu0
      %v480 = vadd.f32 %v259, %v479
      %v481 = vpop.f32.mrb[0].mxu0
      %v482 = vpop.f32.mrb[0].mxu0
      %v483 = vadd.f32 %v259, %v482
      %v484 = vpop.f32.mrb[0].mxu0
      %485 = vmatprep.mubr.bf16.mxu0 0
      %486 = vmatmul.mubr.bf16.gmra.mrb[0].mxu0 %v382
      %v487 = vpop.f32.mrb[0].mxu0
      %v488 = vadd.f32 %v259, %v487
      %v489 = vpop.f32.mrb[0].mxu0
      %v490 = vpop.f32.mrb[0].mxu0
      %v491 = vadd.f32 %v259, %v490
      %v492 = vpop.f32.mrb[0].mxu0
      %493 = vmatprep.mubr.bf16.mxu0 0
      %494 = vmatmul.mubr.bf16.gmra.mrb[0].mxu0 %v385
      %v495 = vpop.f32.mrb[0].mxu0
      %v496 = vadd.f32 %v259, %v495
      %v497 = vpop.f32.mrb[0].mxu0
      %v498 = vpop.f32.mrb[0].mxu0
      %v499 = vadd.f32 %v259, %v498
      %v500 = vpop.f32.mrb[0].mxu0
      %501 = vmatprep.mubr.bf16.mxu0 0
      %502 = vmatmul.mubr.bf16.gmra.mrb[0].mxu0 %v388
      %v503 = vpop.f32.mrb[0].mxu0
      %v504 = vadd.f32 %v259, %v503
      %v505 = vpop.f32.mrb[0].mxu0
      %v506 = vpop.f32.mrb[0].mxu0
      %v507 = vadd.f32 %v259, %v506
      %v508 = vpop.f32.mrb[0].mxu0
      %509 = vmatprep.mubr.bf16.mxu0 0
      %510 = vmatmul.mubr.bf16.gmra.mrb[0].mxu0 %v391
      %v511 = vpop.f32.mrb[0].mxu0
      %v512 = vadd.f32 %v259, %v511
      %v513 = vpop.f32.mrb[0].mxu0
      %v514 = vpop.f32.mrb[0].mxu0
      %v515 = vadd.f32 %v259, %v514
      %v516 = vpop.f32.mrb[0].mxu0
      %517 = vmatprep.mubr.bf16.mxu0 0
      %518 = vmatmul.mubr.bf16.gmra.mrb[0].mxu0 %v394
      %v519 = vpop.f32.mrb[0].mxu0
      %v520 = vadd.f32 %v259, %v519
      %v521 = vpop.f32.mrb[0].mxu0
      %v522 = vpop.f32.mrb[0].mxu0
      %v523 = vadd.f32 %v259, %v522
      %v524 = vpop.f32.mrb[0].mxu0
      %525 = vmatprep.mubr.bf16.mxu0 0
      %526 = vmatmul.mubr.bf16.gmra.mrb[0].mxu0 %v397
      %v527 = vpop.f32.mrb[0].mxu0
      %v528 = vadd.f32 %v259, %v527
      %v529 = vpop.f32.mrb[0].mxu0
      %v530 = vpop.f32.mrb[0].mxu0
      %v531 = vadd.f32 %v259, %v530
      %v532 = vpop.f32.mrb[0].mxu0
      %533 = vmatprep.mubr.bf16.mxu0 0
      %534 = vmatmul.mubr.bf16.gmra.mrb[0].mxu0 %v400
      %v535 = vpop.f32.mrb[0].mxu0
      %v536 = vadd.f32 %v259, %v535
      %v537 = vpop.f32.mrb[0].mxu0
      %v538 = vpop.f32.mrb[0].mxu0
      %v539 = vadd.f32 %v259, %v538
      %v540 = vpop.f32.mrb[0].mxu0
      %541 = vmatprep.mubr.bf16.mxu0 0
      %542 = vmatmul.mubr.bf16.gmra.mrb[0].mxu0 %v403
      %v543 = vpop.f32.mrb[0].mxu0
      %v544 = vadd.f32 %v259, %v543
      %v545 = vpop.f32.mrb[0].mxu0
      %v546 = vpop.f32.mrb[0].mxu0
      %v547 = vadd.f32 %v259, %v546
      %v548 = vpop.f32.mrb[0].mxu0
      %549 = vmatprep.mubr.bf16.mxu0 0
      %550 = vmatmul.mubr.bf16.gmra.mrb[0].mxu0 %v406
      %v551 = vpop.f32.mrb[0].mxu0
      %v552 = vadd.f32 %v259, %v551
      %v553 = vpop.f32.mrb[0].mxu0
      %v554 = vpop.f32.mrb[0].mxu0
      %v555 = vadd.f32 %v259, %v554
      %v556 = vpop.f32.mrb[0].mxu0
      %557 = vmatprep.mubr.bf16.mxu0 0
      %558 = vmatmul.mubr.bf16.gmra.mrb[0].mxu0 %v409
      %v559 = vpop.f32.mrb[0].mxu0
      %v560 = vadd.f32 %v259, %v559
      %v561 = vpop.f32.mrb[0].mxu0
      %v562 = vpop.f32.mrb[0].mxu0
      %v563 = vadd.f32 %v259, %v562
      %v564 = vpop.f32.mrb[0].mxu0
      %565 = vmatprep.mubr.bf16.mxu0 0
      %566 = vmatmul.mubr.bf16.gmra.mrb[0].mxu0 %v412
      %v567 = vpop.f32.mrb[0].mxu0
      %v568 = vadd.f32 %v259, %v567
      %v569 = vpop.f32.mrb[0].mxu0
      %v570 = vpop.f32.mrb[0].mxu0
      %v571 = vadd.f32 %v259, %v570
      %v572 = vpop.f32.mrb[0].mxu0
      %573 = vmatprep.mubr.bf16.mxu0 0
      %574 = vmatmul.mubr.bf16.gmra.mrb[0].mxu0 %v415
      %v575 = vpop.f32.mrb[0].mxu0
      %v576 = vadd.f32 %v259, %v575
      %v577 = vpop.f32.mrb[0].mxu0
      %v578 = vpop.f32.mrb[0].mxu0
      %v579 = vadd.f32 %v259, %v578
      %v580 = vpop.f32.mrb[0].mxu0
      %581 = vdwg.mxu0
      %v582 = vmax.f32 %v456, 0.0
      %v583 = vmax.f32 %v459, 0.0
      %v584 = vmax.f32 %v464, 0.0
      %v585 = vmax.f32 %v467, 0.0
      %v586 = vmax.f32 %v472, 0.0
      %v587 = vmax.f32 %v475, 0.0
      %v588 = vmax.f32 %v480, 0.0
      %v589 = vmax.f32 %v483, 0.0
      %v590 = vmax.f32 %v488, 0.0
      %v591 = vmax.f32 %v491, 0.0
      %v592 = vmax.f32 %v496, 0.0
      %v593 = vmax.f32 %v499, 0.0
      %v594 = vmax.f32 %v504, 0.0
      %v595 = vmax.f32 %v507, 0.0
      %v596 = vmax.f32 %v512, 0.0
      %v597 = vmax.f32 %v515, 0.0
      %v598 = vmax.f32 %v520, 0.0
      %v599 = vmax.f32 %v523, 0.0
      %v600 = vmax.f32 %v528, 0.0
      %v601 = vmax.f32 %v531, 0.0
      %v602 = vmax.f32 %v536, 0.0
      %v603 = vmax.f32 %v539, 0.0
      %v604 = vmax.f32 %v544, 0.0
      %v605 = vmax.f32 %v547, 0.0
      %v606 = vmax.f32 %v552, 0.0
      %v607 = vmax.f32 %v555, 0.0
      %v608 = vmax.f32 %v560, 0.0
      %v609 = vmax.f32 %v563, 0.0
      %v610 = vmax.f32 %v568, 0.0
      %v611 = vmax.f32 %v571, 0.0
      %v612 = vmax.f32 %v576, 0.0
      %v613 = vmax.f32 %v579, 0.0
      %v614 = vpack.c.bf16 %v583, %v582
      %v615 = vpack.c.bf16 %v585, %v584
      %v616 = vpack.c.bf16 %v587, %v586
      %v617 = vpack.c.bf16 %v589, %v588
      %v618 = vpack.c.bf16 %v591, %v590
      %v619 = vpack.c.bf16 %v593, %v592
      %v620 = vpack.c.bf16 %v595, %v594
      %v621 = vpack.c.bf16 %v597, %v596
      %v622 = vpack.c.bf16 %v599, %v598
      %v623 = vpack.c.bf16 %v601, %v600
      %v624 = vpack.c.bf16 %v603, %v602
      %v625 = vpack.c.bf16 %v605, %v604
      %v626 = vpack.c.bf16 %v607, %v606
      %v627 = vpack.c.bf16 %v609, %v608
      %v628 = vpack.c.bf16 %v611, %v610
      %v629 = vpack.c.bf16 %v613, %v612
      %v646 = vunpack.c.l.b16 %v614
      %v647 = vunpack.c.h.b16 %v614
      %v648 = vunpack.c.l.b16 %v615
      %v649 = vunpack.c.h.b16 %v615
      %v650 = vunpack.c.l.b16 %v616
      %v651 = vunpack.c.h.b16 %v616
      %v652 = vunpack.c.l.b16 %v617
      %v653 = vunpack.c.h.b16 %v617
      %v654 = vunpack.c.l.b16 %v618
      %v655 = vunpack.c.h.b16 %v618
      %v656 = vunpack.c.l.b16 %v619
      %v657 = vunpack.c.h.b16 %v619
      %v658 = vunpack.c.l.b16 %v620
      %v659 = vunpack.c.h.b16 %v620
      %v660 = vunpack.c.l.b16 %v621
      %v661 = vunpack.c.h.b16 %v621
      %v662 = vunpack.c.l.b16 %v622
      %v663 = vunpack.c.h.b16 %v622
      %v664 = vunpack.c.l.b16 %v623
      %v665 = vunpack.c.h.b16 %v623
      %v666 = vunpack.c.l.b16 %v624
      %v667 = vunpack.c.h.b16 %v624
      %v668 = vunpack.c.l.b16 %v625
      %v669 = vunpack.c.h.b16 %v625
      %v670 = vunpack.c.l.b16 %v626
      %v671 = vunpack.c.h.b16 %v626
      %v672 = vunpack.c.l.b16 %v627
      %v673 = vunpack.c.h.b16 %v627
      %v674 = vunpack.c.l.b16 %v628
      %v675 = vunpack.c.h.b16 %v628
      %v676 = vunpack.c.l.b16 %v629
      %v677 = vunpack.c.h.b16 %v629
      %v678 = vpack.c.b16 %v646, %v646
      %v679 = vpack.c.b16 %v647, %v647
      %v680 = vpack.c.b16 %v648, %v648
      %v681 = vpack.c.b16 %v649, %v649
      %v682 = vpack.c.b16 %v650, %v650
      %v683 = vpack.c.b16 %v651, %v651
      %v684 = vpack.c.b16 %v652, %v652
      %v685 = vpack.c.b16 %v653, %v653
      %v686 = vpack.c.b16 %v654, %v654
      %v687 = vpack.c.b16 %v655, %v655
      %v688 = vpack.c.b16 %v656, %v656
      %v689 = vpack.c.b16 %v657, %v657
      %v690 = vpack.c.b16 %v658, %v658
      %v691 = vpack.c.b16 %v659, %v659
      %v692 = vpack.c.b16 %v660, %v660
      %v693 = vpack.c.b16 %v661, %v661
      %v694 = vpack.c.b16 %v662, %v662
      %v695 = vpack.c.b16 %v663, %v663
      %v696 = vpack.c.b16 %v664, %v664
      %v697 = vpack.c.b16 %v665, %v665
      %v698 = vpack.c.b16 %v666, %v666
      %v699 = vpack.c.b16 %v667, %v667
      %v700 = vpack.c.b16 %v668, %v668
      %v701 = vpack.c.b16 %v669, %v669
      %v702 = vpack.c.b16 %v670, %v670
      %v703 = vpack.c.b16 %v671, %v671
      %v704 = vpack.c.b16 %v672, %v672
      %v705 = vpack.c.b16 %v673, %v673
      %v706 = vpack.c.b16 %v674, %v674
      %v707 = vpack.c.b16 %v675, %v675
      %v708 = vpack.c.b16 %v676, %v676
      %v709 = vpack.c.b16 %v677, %v677
      %742 = vst [vmem:[%s206] sm:$0xf] %v678
      %743 = vst [vmem:[%s206 + $0x4] sm:$0xf] %v679
      %744 = vst [vmem:[%s206 + $0x8] sm:$0xf] %v680
      %745 = vst [vmem:[%s206 + $0xc] sm:$0xf] %v681
      %746 = vst [vmem:[%s206 + $0x10] sm:$0xf] %v682
      %747 = vst [vmem:[%s206 + $0x14] sm:$0xf] %v683
      %748 = vst [vmem:[%s206 + $0x18] sm:$0xf] %v684
      %749 = vst [vmem:[%s206 + $0x1c] sm:$0xf] %v685
      %750 = vst [vmem:[%s206 + $0x20] sm:$0xf] %v686
      %751 = vst [vmem:[%s206 + $0x24] sm:$0xf] %v687
      %752 = vst [vmem:[%s206 + $0x28] sm:$0xf] %v688
      %753 = vst [vmem:[%s206 + $0x2c] sm:$0xf] %v689
      %754 = vst [vmem:[%s206 + $0x30] sm:$0xf] %v690
      %755 = vst [vmem:[%s206 + $0x34] sm:$0xf] %v691
      %756 = vst [vmem:[%s206 + $0x38] sm:$0xf] %v692
      %757 = vst [vmem:[%s206 + $0x3c] sm:$0xf] %v693
      %758 = vst [vmem:[%s206 + $0x40] sm:$0xf] %v694
      %759 = vst [vmem:[%s206 + $0x44] sm:$0xf] %v695
      %760 = vst [vmem:[%s206 + $0x48] sm:$0xf] %v696
      %761 = vst [vmem:[%s206 + $0x4c] sm:$0xf] %v697
      %762 = vst [vmem:[%s206 + $0x50] sm:$0xf] %v698
      %763 = vst [vmem:[%s206 + $0x54] sm:$0xf] %v699
      %764 = vst [vmem:[%s206 + $0x58] sm:$0xf] %v700
      %765 = vst [vmem:[%s206 + $0x5c] sm:$0xf] %v701
      %766 = vst [vmem:[%s206 + $0x60] sm:$0xf] %v702
      %767 = vst [vmem:[%s206 + $0x64] sm:$0xf] %v703
      %768 = vst [vmem:[%s206 + $0x68] sm:$0xf] %v704
      %769 = vst [vmem:[%s206 + $0x6c] sm:$0xf] %v705
      %770 = vst [vmem:[%s206 + $0x70] sm:$0xf] %v706
      %771 = vst [vmem:[%s206 + $0x74] sm:$0xf] %v707
      %772 = vst [vmem:[%s206 + $0x78] sm:$0xf] %v708
      %773 = vst [vmem:[%s206 + $0x7c] sm:$0xf] %v709
      %v774 = vadd.f32 %v582, %v583
      %v775 = vadd.f32 %v774, %v584
      %v776 = vadd.f32 %v775, %v585
      %v777 = vadd.f32 %v776, %v586
      %v778 = vadd.f32 %v777, %v587
      %v779 = vadd.f32 %v778, %v588
      %v780 = vadd.f32 %v779, %v589
      %v781 = vadd.f32 %v780, %v590
      %v782 = vadd.f32 %v781, %v591
      %v783 = vadd.f32 %v782, %v592
      %v784 = vadd.f32 %v783, %v593
      %v785 = vadd.f32 %v784, %v594
      %v786 = vadd.f32 %v785, %v595
      %v787 = vadd.f32 %v786, %v596
      %v788 = vadd.f32 %v787, %v597
      %v789 = vadd.f32 %v788, %v598
      %v790 = vadd.f32 %v789, %v599
      %v791 = vadd.f32 %v790, %v600
      %v792 = vadd.f32 %v791, %v601
      %v793 = vadd.f32 %v792, %v602
      %v794 = vadd.f32 %v793, %v603
      %v795 = vadd.f32 %v794, %v604
      %v796 = vadd.f32 %v795, %v605
      %v797 = vadd.f32 %v796, %v606
      %v798 = vadd.f32 %v797, %v607
      %v799 = vadd.f32 %v798, %v608
      %v800 = vadd.f32 %v799, %v609
      %v801 = vadd.f32 %v800, %v610
      %v802 = vadd.f32 %v801, %v611
      %v803 = vadd.f32 %v802, %v612
      %v804 = vadd.f32 %v803, %v613
      %v805 = vrot.slane %v804, 4
      %v806 = vadd.f32 %v804, %v805
      %v807 = vrot.slane %v806, 2
      %v808 = vadd.f32 %v806, %v807
      %v809 = vrot.slane %v808, 1
      %v810 = vadd.f32 %v808, %v809
      %v811 = vmul.f32 %v810, 0.00390625
      %v812 = vsub.f32 %v582, %v811
      %v813 = vsub.f32 %v583, %v811
      %v814 = vsub.f32 %v584, %v811
      %v815 = vsub.f32 %v585, %v811
      %v816 = vsub.f32 %v586, %v811
      %v817 = vsub.f32 %v587, %v811
      %v818 = vsub.f32 %v588, %v811
      %v819 = vsub.f32 %v589, %v811
      %v820 = vsub.f32 %v590, %v811
      %v821 = vsub.f32 %v591, %v811
      %v822 = vsub.f32 %v592, %v811
      %v823 = vsub.f32 %v593, %v811
      %v824 = vsub.f32 %v594, %v811
      %v825 = vsub.f32 %v595, %v811
      %v826 = vsub.f32 %v596, %v811
      %v827 = vsub.f32 %v597, %v811
      %v828 = vsub.f32 %v598, %v811
      %v829 = vsub.f32 %v599, %v811
      %v830 = vsub.f32 %v600, %v811
      %v831 = vsub.f32 %v601, %v811
      %v832 = vsub.f32 %v602, %v811
      %v833 = vsub.f32 %v603, %v811
      %v834 = vsub.f32 %v604, %v811
      %v835 = vsub.f32 %v605, %v811
      %v836 = vsub.f32 %v606, %v811
      %v837 = vsub.f32 %v607, %v811
      %v838 = vsub.f32 %v608, %v811
      %v839 = vsub.f32 %v609, %v811
      %v840 = vsub.f32 %v610, %v811
      %v841 = vsub.f32 %v611, %v811
      %v842 = vsub.f32 %v612, %v811
      %v843 = vsub.f32 %v613, %v811
      %844 = vst [vmem:[%s211] sm:$0x1] %v810
      %v845 = vmul.f32 %v812, %v812
      %v846 = vmul.f32 %v813, %v813
      %v847 = vmul.f32 %v814, %v814
      %v848 = vmul.f32 %v815, %v815
      %v849 = vmul.f32 %v816, %v816
      %v850 = vmul.f32 %v817, %v817
      %v851 = vmul.f32 %v818, %v818
      %v852 = vmul.f32 %v819, %v819
      %v853 = vmul.f32 %v820, %v820
      %v854 = vmul.f32 %v821, %v821
      %v855 = vmul.f32 %v822, %v822
      %v856 = vmul.f32 %v823, %v823
      %v857 = vmul.f32 %v824, %v824
      %v858 = vmul.f32 %v825, %v825
      %v859 = vmul.f32 %v826, %v826
      %v860 = vmul.f32 %v827, %v827
      %v861 = vmul.f32 %v828, %v828
      %v862 = vmul.f32 %v829, %v829
      %v863 = vmul.f32 %v830, %v830
      %v864 = vmul.f32 %v831, %v831
      %v865 = vmul.f32 %v832, %v832
      %v866 = vmul.f32 %v833, %v833
      %v867 = vmul.f32 %v834, %v834
      %v868 = vmul.f32 %v835, %v835
      %v869 = vmul.f32 %v836, %v836
      %v870 = vmul.f32 %v837, %v837
      %v871 = vmul.f32 %v838, %v838
      %v872 = vmul.f32 %v839, %v839
      %v873 = vmul.f32 %v840, %v840
      %v874 = vmul.f32 %v841, %v841
      %v875 = vmul.f32 %v842, %v842
      %v876 = vmul.f32 %v843, %v843
      %v877 = vadd.f32 %v845, %v846
      %v878 = vadd.f32 %v877, %v847
      %v879 = vadd.f32 %v878, %v848
      %v880 = vadd.f32 %v879, %v849
      %v881 = vadd.f32 %v880, %v850
      %v882 = vadd.f32 %v881, %v851
      %v883 = vadd.f32 %v882, %v852
      %v884 = vadd.f32 %v883, %v853
      %v885 = vadd.f32 %v884, %v854
      %v886 = vadd.f32 %v885, %v855
      %v887 = vadd.f32 %v886, %v856
      %v888 = vadd.f32 %v887, %v857
      %v889 = vadd.f32 %v888, %v858
      %v890 = vadd.f32 %v889, %v859
      %v891 = vadd.f32 %v890, %v860
      %v892 = vadd.f32 %v891, %v861
      %v893 = vadd.f32 %v892, %v862
      %v894 = vadd.f32 %v893, %v863
      %v895 = vadd.f32 %v894, %v864
      %v896 = vadd.f32 %v895, %v865
      %v897 = vadd.f32 %v896, %v866
      %v898 = vadd.f32 %v897, %v867
      %v899 = vadd.f32 %v898, %v868
      %v900 = vadd.f32 %v899, %v869
      %v901 = vadd.f32 %v900, %v870
      %v902 = vadd.f32 %v901, %v871
      %v903 = vadd.f32 %v902, %v872
      %v904 = vadd.f32 %v903, %v873
      %v905 = vadd.f32 %v904, %v874
      %v906 = vadd.f32 %v905, %v875
      %v907 = vadd.f32 %v906, %v876
      %v908 = vrot.slane %v907, 4
      %v909 = vadd.f32 %v907, %v908
      %v910 = vrot.slane %v909, 2
      %v911 = vadd.f32 %v909, %v910
      %v912 = vrot.slane %v911, 1
      %v913 = vadd.f32 %v911, %v912
      %914 = vst [vmem:[%s211 + $0x1] sm:$0x1] %v913
      %s915 = smul.u32 32, %s16
      %p916 = scmp.lt.s32.totalorder %s915, 63
      %s917 = scalar_select %p916, %s915, 63
      %s918 = smul.addr %s917, 4
      %s919 = scalar_lea.vmem %s3, %s918
      %p920 = scmp.lt.s32.totalorder %s16, 1
      %s921 = scalar_select %p920, %s16, 1
      %s922 = smul.addr %s921, 2
      %s923 = scalar_lea.vmem %s4, %s922
      // Predicated region
      $region33: #{_forward.1} parent=31 // pred_check
        %p924 = pneg %p102
      $region34: #{_forward.1} parent=31 // pred_check_branch
        %926 = sbr.rel (%p924) target = $region36
      $region35: #{_forward.1} parent=31 // pred_region
        %s927 = smul.u32 32, %s16
      $region36: #{_forward.1} parent=31 // pred_fallthru
        _
      // Predicated region
      $region37: #{_forward.1} parent=31 // pred_check
        %p928 = pneg %p128
      $region38: #{_forward.1} parent=31 // pred_check_branch
        %930 = sbr.rel (%p928) target = $region40
      $region39: #{_forward.1} parent=31 // pred_region
        _
      $region40: #{_forward.1} parent=31 // pred_fallthru
        _
    $region32: #{_forward.1} parent=5 // pred_fallthru
      _
    %p931 = scmp.le.s32.totalorder 2, %s11
    // Predicated region
    $region41: #{_forward.1} parent=5 // pred_check
      %p932 = pneg %p931
    $region42: #{_forward.1} parent=5 // pred_check_branch
      %934 = sbr.rel (%p932) target = $region44
    $region43: #{_forward.1} parent=5 // pred_region
      %s935 = ssub.s32 %s11, 2
      // Predicated region
      $region45: #{_forward.1} parent=43 // pred_check
        %p936 = pneg %p108
      $region46: #{_forward.1} parent=43 // pred_check_branch
        %938 = sbr.rel (%p936) target = $region48
      $region47: #{_forward.1} parent=43 // pred_region
        %s939 = smul.u32 32, %s17
        %p940 = scmp.lt.s32.totalorder %s939, 63
        %s941 = scalar_select %p940, %s939, 63
        %s942 = smul.addr %s941, 4
        %s943 = scalar_lea.vmem %s3, %s942
      $region48: #{_forward.1} parent=43 // pred_fallthru
        _
      // Predicated region
      $region49: #{_forward.1} parent=43 // pred_check
        %p944 = pneg %p134
      $region50: #{_forward.1} parent=43 // pred_check_branch
        %946 = sbr.rel (%p944) target = $region52
      $region51: #{_forward.1} parent=43 // pred_region
        %p947 = scmp.lt.s32.totalorder %s17, 1
        %s948 = scalar_select %p947, %s17, 1
        %s949 = smul.addr %s948, 2
        %s950 = scalar_lea.vmem %s4, %s949
      $region52: #{_forward.1} parent=43 // pred_fallthru
        _
    $region44: #{_forward.1} parent=5 // pred_fallthru
      _
  $region6: #{_forward.1} parent=0 // loop_footer
    %s15 = sadd.s32 1, %s11
  $region7: #{_forward.1} parent=0 // loop_footer_branch
    %10 = sbr.rel target = $region3
  $region8: #{_forward.1} parent=0 // loop_exit
    _

</llo_original>
